<compile_context>
chip_gen: v6e
topology: v6e:2x2x1
jax: 0.10.0
libtpu: 0.0.40
codegen_flags: <defaults>
</compile_context>

<pallas_src>
import math

import jax
import jax.numpy as jnp
from jax.experimental import pallas as pl
from jax.experimental.pallas import tpu as pltpu


# ---------------------------------------------------------------------------
# Kernels
# ---------------------------------------------------------------------------
def _attention_kernel_folded(wb_ref, e_ref, f_ref, x_ref, wo_ref, sc_ref):
    """Lane-dense small-H path.

    wb_ref: (T*H, T)  block-diagonal weights  Wb[t*H+h, t'] = delta(t,t') * w[h]
    e_ref : (T, T*H)  score expansion         E[t', t*H+h]  = delta(t,t')
    f_ref : (T*H, H)  fold-sum                F[t*H+h, h']  = delta(h,h')
    x_ref : (Bt, T*H) folded input block (x[b, t*H+h] == x[b, t, h])
    """
    x2 = x_ref[...]                                               # (Bt, T*H), native dtype

    # logits[b, t] = sum_h x[b, t, h] * w[h]  -- single MXU matmul, lane-dense LHS.
    logits = jnp.dot(x2, wb_ref[...], preferred_element_type=jnp.float32)   # (Bt, T)

    # Numerically-stable softmax over T with EXACT normalization (nn.Softmax(dim=1)).
    m = jnp.max(logits, axis=-1, keepdims=True)
    e = jnp.exp(logits - m)
    s = e / jnp.sum(e, axis=-1, keepdims=True)                    # (Bt, T), f32
    sc_ref[...] = s.astype(sc_ref.dtype)

    # Broadcast each score across its H-segment of the folded lane axis (tiny MXU op),
    # then fold-sum over T with a second MXU matmul (f32 accumulation).
    s_rep = jnp.dot(s.astype(x2.dtype), e_ref[...])               # (Bt, T*H), native dtype
    wo = jnp.dot(x2 * s_rep, f_ref[...],
                 preferred_element_type=jnp.float32)              # (Bt, H)
    wo_ref[...] = wo.astype(wo_ref.dtype)


def _attention_kernel_general(w_ref, x_ref, wo_ref, sc_ref):
    """General path (H >= 128).

    w_ref: (H, 1) attention weights (column vector)
    x_ref: (Bt, T, H) input block
    """
    Bt, T, H = x_ref.shape
    x = x_ref[...]                                                # native dtype, no f32 copy

    # logits via the MXU: fold (Bt, T) into rows and contract H against the weight
    # column (avoids a 128-lane XLU reduction per output vreg).
    x2 = x.reshape(Bt * T, H)
    logits = jnp.dot(x2, w_ref[...], preferred_element_type=jnp.float32)    # (Bt*T, 1)
    logits = logits.reshape(Bt, T)

    # Exact softmax over T.
    m = jnp.max(logits, axis=-1, keepdims=True)
    e = jnp.exp(logits - m)
    s = e / jnp.sum(e, axis=-1, keepdims=True)                    # (Bt, T), f32
    sc_ref[...] = s.astype(sc_ref.dtype)

    # weighted_output = sum_T scores * x : VPU multiply + sublane (T-axis) reduce,
    # accumulated in f32.  Multiply stays in the input dtype to avoid a block-sized
    # f32 copy for bf16 inputs.
    wo = jnp.sum(s.astype(x.dtype)[:, :, None] * x, axis=1, dtype=jnp.float32)  # (Bt, H)
    wo_ref[...] = wo.astype(wo_ref.dtype)


# ---------------------------------------------------------------------------
# Wrapper
# ---------------------------------------------------------------------------
def _vmem_capacity_bytes():
    try:
        cap = int(pltpu.get_tpu_info().vmem_capacity_bytes)
        if cap > 0:
            return cap
    except Exception:
        pass
    return 64 * 1024 * 1024   # conservative default (v7x per-TensorCore VMEM)


def attention_forward(x, att_weights, *, block_b=None):
    """x: (B, T, H), att_weights: (1, H) -> (weighted_output (B, H), scores (B, T))."""
    B, T, H = x.shape
    dtype = x.dtype
    itemsize = jnp.dtype(dtype).itemsize

    # Lane-dense folded path for small hidden sizes (module spec: H=32, T=8 -> T*H=256).
    use_folded = (H < 128) and (T * H <= 2048)

    # Generation-aware VMEM budget: 75% of per-core VMEM, capped at 96 MiB
    # (v7x: 48 MiB, v5e/v6e: 96 MiB).
    vmem_cap = _vmem_capacity_bytes()
    vmem_budget = min((vmem_cap * 3) // 4, 96 * 1024 * 1024)

    row_bytes = T * H * itemsize

    if block_b is None:
        # ~1/6 of the budget per x block: 2x double-buffered input + ~3 block-sized
        # intermediates + headroom -> ~8 MiB blocks on v7x, ~16 MiB on v5e/v6e.
        target_bytes = max(vmem_budget // 6, 1 << 20)
        block_b = max(1, target_bytes // max(row_bytes, 1))
        if B >= 32:
            block_b = min(block_b, pl.cdiv(B, 4))   # >=4 steps: both v7x TCs + pipeline
        elif B >= 16:
            block_b = min(block_b, pl.cdiv(B, 2))   # >=2 steps
        block_b = min(block_b, B)

    if block_b < B:
        # Sublane-align tiled batch blocks (second-to-last dim of out blocks).
        block_b = max(8, (block_b // 8) * 8)

    grid_b = pl.cdiv(B, block_b)
    b_padded = grid_b * block_b

    # Clamp the VMEM limit against the actual requirement (tiny-B can force an
    # 8-row minimum block that overshoots the heuristic target).
    est_need = 6 * block_b * row_bytes + (4 << 20)
    vmem_limit = int(min(max(vmem_budget, est_need), (vmem_cap * 9) // 10))

    cparams = pltpu.CompilerParams(
        dimension_semantics=("parallel",),
        vmem_limit_bytes=vmem_limit,
    )
    cost = pl.CostEstimate(
        flops=4 * b_padded * T * H,
        transcendentals=b_padded * T,
        bytes_accessed=itemsize * (b_padded * (T * H + H + T) + H),
    )
    out_shape = (
        jax.ShapeDtypeStruct((b_padded, H), dtype),
        jax.ShapeDtypeStruct((b_padded, T), dtype),
    )

    if use_folded:
        # Fold (T, H) into a single lane-dense axis; build tiny constant helper
        # matrices so all contractions run on the MXU inside the kernel.
        x2 = x.reshape(B, T * H)
        if b_padded != B:
            x2 = jnp.pad(x2, ((0, b_padded - B), (0, 0)))
        w_col = att_weights.reshape(H, 1).astype(dtype)
        eye_t = jnp.eye(T, dtype=dtype)
        wb = jnp.kron(eye_t, w_col)                                      # (T*H, T)
        e_mat = jnp.kron(eye_t, jnp.ones((1, H), dtype=dtype))           # (T, T*H)
        f_mat = jnp.kron(jnp.ones((T, 1), dtype=dtype),
                         jnp.eye(H, dtype=dtype))                        # (T*H, H)

        wo, sc = pl.pallas_call(
            _attention_kernel_folded,
            out_shape=out_shape,
            grid=(grid_b,),
            in_specs=[
                pl.BlockSpec((T * H, T), lambda b: (0, 0)),      # constant -> fetched once
                pl.BlockSpec((T, T * H), lambda b: (0, 0)),
                pl.BlockSpec((T * H, H), lambda b: (0, 0)),
                pl.BlockSpec((block_b, T * H), lambda b: (b, 0)),
            ],
            out_specs=(
                pl.BlockSpec((block_b, H), lambda b: (b, 0)),
                pl.BlockSpec((block_b, T), lambda b: (b, 0)),
            ),
            compiler_params=cparams,
            cost_estimate=cost,
        )(wb, e_mat, f_mat, x2)
    else:
        xp = x
        if b_padded != B:
            xp = jnp.pad(x, ((0, b_padded - B), (0, 0), (0, 0)))
        w_col = att_weights.reshape(H, 1).astype(dtype)

        wo, sc = pl.pallas_call(
            _attention_kernel_general,
            out_shape=out_shape,
            grid=(grid_b,),
            in_specs=[
                pl.BlockSpec((H, 1), lambda b: (0, 0)),          # constant -> fetched once
                pl.BlockSpec((block_b, T, H), lambda b: (b, 0, 0)),
            ],
            out_specs=(
                pl.BlockSpec((block_b, H), lambda b: (b, 0)),
                pl.BlockSpec((block_b, T), lambda b: (b, 0)),
            ),
            compiler_params=cparams,
            cost_estimate=cost,
        )(w_col, xp)

    return wo[:B], sc[:B]


# ---------------------------------------------------------------------------
# Reference + self-test
# ---------------------------------------------------------------------------
def _reference(x, att_weights):
    # Pure elementwise/reduce reference (no matmul -> no TPU precision ambiguity).
    w = att_weights.reshape(-1)
    logits = jnp.sum(x * w[None, None, :], axis=-1)               # (B, T)
    scores = jax.nn.softmax(logits, axis=1)                       # softmax over T
    weighted = jnp.sum(scores[:, :, None] * x, axis=1)            # (B, H)
    return weighted, scores


def _make_inputs(key, B, T, H):
    k_x, k_w = jax.random.split(key)
    x = jax.random.normal(k_x, (B, T, H), dtype=jnp.float32)
    # Xavier-uniform init for att_weights of shape (1, H): bound = sqrt(6 / (1 + H)).
    bound = math.sqrt(6.0 / (1 + H))
    att_weights = jax.random.uniform(
        k_w, (1, H), dtype=jnp.float32, minval=-bound, maxval=bound
    )
    return x, att_weights


if __name__ == "__main__":
    # Tolerances cover MXU f32 matmul pass behaviour; genuine semantic errors
    # (wrong axis / missing normalization) would be orders of magnitude larger.
    ATOL = RTOL = 5e-3

    # 1) Module-spec shape (batch=2, seq=8, hidden=32) -> folded lane-dense kernel.
    x, w = _make_inputs(jax.random.PRNGKey(0), B=2, T=8, H=32)
    wo, sc = attention_forward(x, w)
    jax.block_until_ready((wo, sc))
    ref_wo, ref_sc = _reference(x, w)
    assert wo.shape == (2, 32) and sc.shape == (2, 8)
    # Exact softmax normalization (the previous approx-reciprocal bug is gone).
    assert jnp.allclose(jnp.sum(sc, axis=1), 1.0, atol=1e-5)
    assert jnp.allclose(wo, ref_wo, atol=ATOL, rtol=RTOL)
    assert jnp.allclose(sc, ref_sc, atol=ATOL, rtol=RTOL)

    # 2) Padded, multi-step batch grid through the folded kernel.
    x2, w2 = _make_inputs(jax.random.PRNGKey(1), B=37, T=8, H=32)
    wo2, sc2 = attention_forward(x2, w2)
    jax.block_until_ready((wo2, sc2))
    ref_wo2, ref_sc2 = _reference(x2, w2)
    assert wo2.shape == (37, 32) and sc2.shape == (37, 8)
    assert jnp.allclose(wo2, ref_wo2, atol=ATOL, rtol=RTOL)
    assert jnp.allclose(sc2, ref_sc2, atol=ATOL, rtol=RTOL)

    # 3) General (H >= 128) kernel: MXU logits + sublane-reduce weighted sum.
    x3, w3 = _make_inputs(jax.random.PRNGKey(2), B=16, T=16, H=128)
    wo3, sc3 = attention_forward(x3, w3)
    jax.block_until_ready((wo3, sc3))
    ref_wo3, ref_sc3 = _reference(x3, w3)
    assert wo3.shape == (16, 128) and sc3.shape == (16, 16)
    assert jnp.allclose(wo3, ref_wo3, atol=ATOL, rtol=RTOL)
    assert jnp.allclose(sc3, ref_sc3, atol=ATOL, rtol=RTOL)

    print("KERNEL_OK")
</pallas_src>

<mosaic_0001>
module attributes {stable_mosaic.version = 11 : i64} {
  func.func @_attention_kernel_folded(%arg0: i32, %arg1: memref<256x8xf32, #tpu.memory_space<vmem>>, %arg2: memref<8x256xf32, #tpu.memory_space<vmem>>, %arg3: memref<256x32xf32, #tpu.memory_space<vmem>>, %arg4: memref<2x256xf32, #tpu.memory_space<vmem>>, %arg5: memref<2x32xf32, #tpu.memory_space<vmem>>, %arg6: memref<2x8xf32, #tpu.memory_space<vmem>>) attributes {dimension_semantics = [#tpu.dimension_semantics<parallel>], iteration_bounds = array<i64: 1>, scalar_prefetch = 0 : i64, scratch_operands = 0 : i64, tpu.core_type = #tpu.core_type<tc>, window_params = [{pipeline_mode = #tpu.pipeline_mode<synchronous>, transform_indices = @transform_0, window_bounds = array<i64: 256, 8>}, {pipeline_mode = #tpu.pipeline_mode<synchronous>, transform_indices = @transform_1, window_bounds = array<i64: 8, 256>}, {pipeline_mode = #tpu.pipeline_mode<synchronous>, transform_indices = @transform_2, window_bounds = array<i64: 256, 32>}, {transform_indices = @transform_3, window_bounds = array<i64: 2, 256>}, {transform_indices = @transform_4, window_bounds = array<i64: 2, 32>}, {transform_indices = @transform_5, window_bounds = array<i64: 2, 8>}]} {
    %c0 = arith.constant 0 : index
    %c0_0 = arith.constant 0 : index
    %0 = vector.load %arg4[%c0, %c0_0] : memref<2x256xf32, #tpu.memory_space<vmem>>, vector<2x256xf32>
    %c0_1 = arith.constant 0 : index
    %c0_2 = arith.constant 0 : index
    %1 = vector.load %arg1[%c0_1, %c0_2] : memref<256x8xf32, #tpu.memory_space<vmem>>, vector<256x8xf32>
    %cst = arith.constant dense<0.000000e+00> : vector<2x8xf32>
    %2 = tpu.matmul %0, %1, %cst {dimension_numbers = #tpu.dot_dimension_numbers<[1], [0], [0], [1], [0, 0, 1, 1], [], []>} : vector<2x256xf32>, vector<256x8xf32>, vector<2x8xf32> -> vector<2x8xf32>
    %cst_3 = arith.constant dense<0xFF800000> : vector<2xf32>
    %3 = vector.multi_reduction <maximumf>, %2, %cst_3 [1] : vector<2x8xf32> to vector<2xf32>
    %4 = vector.shape_cast %3 : vector<2xf32> to vector<2x1xf32>
    %5 = vector.broadcast %4 : vector<2x1xf32> to vector<2x8xf32>
    %6 = arith.subf %2, %5 : vector<2x8xf32>
    %7 = math.exp %6 : vector<2x8xf32>
    %cst_4 = arith.constant dense<0.000000e+00> : vector<2xf32>
    %8 = vector.multi_reduction <add>, %7, %cst_4 [1] : vector<2x8xf32> to vector<2xf32>
    %9 = vector.shape_cast %8 : vector<2xf32> to vector<2x1xf32>
    %10 = vector.broadcast %9 : vector<2x1xf32> to vector<2x8xf32>
    %11 = arith.divf %7, %10 : vector<2x8xf32>
    %c0_5 = arith.constant 0 : index
    %c0_6 = arith.constant 0 : index
    %12 = vector.load %arg6[%c0_5, %c0_6] : memref<2x8xf32, #tpu.memory_space<vmem>>, vector<2x8xf32>
    tpu.vector_store %arg6[%c0_5, %c0_6], %11 {strides = array<i32>} : memref<2x8xf32, #tpu.memory_space<vmem>>, vector<2x8xf32>,
    %c0_7 = arith.constant 0 : index
    %c0_8 = arith.constant 0 : index
    %13 = vector.load %arg2[%c0_7, %c0_8] : memref<8x256xf32, #tpu.memory_space<vmem>>, vector<8x256xf32>
    %cst_9 = arith.constant dense<0.000000e+00> : vector<2x256xf32>
    %14 = tpu.matmul %11, %13, %cst_9 {dimension_numbers = #tpu.dot_dimension_numbers<[1], [0], [0], [1], [0, 0, 1, 1], [], []>} : vector<2x8xf32>, vector<8x256xf32>, vector<2x256xf32> -> vector<2x256xf32>
    %15 = arith.mulf %0, %14 : vector<2x256xf32>
    %c0_10 = arith.constant 0 : index
    %c0_11 = arith.constant 0 : index
    %16 = vector.load %arg3[%c0_10, %c0_11] : memref<256x32xf32, #tpu.memory_space<vmem>>, vector<256x32xf32>
    %cst_12 = arith.constant dense<0.000000e+00> : vector<2x32xf32>
    %17 = tpu.matmul %15, %16, %cst_12 {dimension_numbers = #tpu.dot_dimension_numbers<[1], [0], [0], [1], [0, 0, 1, 1], [], []>} : vector<2x256xf32>, vector<256x32xf32>, vector<2x32xf32> -> vector<2x32xf32>
    %c0_13 = arith.constant 0 : index
    %c0_14 = arith.constant 0 : index
    %18 = vector.load %arg5[%c0_13, %c0_14] : memref<2x32xf32, #tpu.memory_space<vmem>>, vector<2x32xf32>
    tpu.vector_store %arg5[%c0_13, %c0_14], %17 {strides = array<i32>} : memref<2x32xf32, #tpu.memory_space<vmem>>, vector<2x32xf32>,
    return
  }
  func.func @transform_0(%arg0: i32) -> (i32, i32) {
    %c0_i32 = arith.constant 0 : i32
    %c0_i32_0 = arith.constant 0 : i32
    %c0_i32_1 = arith.constant 0 : i32
    return %c0_i32, %c0_i32_0 : i32, i32
  }
  func.func @transform_1(%arg0: i32) -> (i32, i32) {
    %c0_i32 = arith.constant 0 : i32
    %c0_i32_0 = arith.constant 0 : i32
    %c0_i32_1 = arith.constant 0 : i32
    return %c0_i32, %c0_i32_0 : i32, i32
  }
  func.func @transform_2(%arg0: i32) -> (i32, i32) {
    %c0_i32 = arith.constant 0 : i32
    %c0_i32_0 = arith.constant 0 : i32
    %c0_i32_1 = arith.constant 0 : i32
    return %c0_i32, %c0_i32_0 : i32, i32
  }
  func.func @transform_3(%arg0: i32) -> (i32, i32) {
    %c0_i32 = arith.constant 0 : i32
    %c0_i32_0 = arith.constant 0 : i32
    return %arg0, %c0_i32 : i32, i32
  }
  func.func @transform_4(%arg0: i32) -> (i32, i32) {
    %c0_i32 = arith.constant 0 : i32
    %c0_i32_0 = arith.constant 0 : i32
    return %arg0, %c0_i32 : i32, i32
  }
  func.func @transform_5(%arg0: i32) -> (i32, i32) {
    %c0_i32 = arith.constant 0 : i32
    %c0_i32_0 = arith.constant 0 : i32
    return %arg0, %c0_i32 : i32, i32
  }
}

</mosaic_0001>

<llo_original>
// kernel: tpu_custom_call.1
$region0: #{tpu_custom_call.1}
  #allocation0 [shape = 'u32[]', space=smem, size = 0x4, offset = 0x4, fixed_abs, tag = 'smem constant byte address 0x4 - core index']
  #allocation1 [shape = 'u32[144,128]{1,0:T(1,128)}', space=vmem, size = 0x12000, scoped, tag = 'internal scratch']
  %s0 = inlined_call_operand.vmem [shape: f32[256,8], index: 0, kind: input, shape index: {}]
  %s1 = inlined_call_operand.vmem [shape: f32[8,256], index: 1, kind: input, shape index: {}]
  %s2 = inlined_call_operand.vmem [shape: f32[256,32], index: 2, kind: input, shape index: {}]
  %s3 = inlined_call_operand.vmem [shape: f32[2,256], index: 3, kind: input, shape index: {}]
  %s4 = inlined_call_operand.hbm [shape: f32[2,32], index: 4, kind: output, shape index: {0}]
  %s5 = inlined_call_operand.hbm [shape: f32[2,8], index: 5, kind: output, shape index: {1}]
  %6 = xla_tuple %s4, %s5
  %s7 = sld [smem:[#allocation0]]
  $region34: #{tpu_custom_call.1} parent=0
    _
  %s9 = ssub.s32 1, %s7
  %s10 = scalar_select 0, %s9, %s7
  $region1: #{tpu_custom_call.1} parent=0
    #allocation2 [shape = 'u8[1024]{0}', space=vmem, size = 0x400, scoped, tag = 'output window, operand 0, single buffered']
    #allocation3 [shape = 's32[1]{0}', space=sflag, size = 0x4, scoped, tag = 'scoped memory for tpu_custom_call.1']
    #allocation4 [shape = 'u8[1024]{0}', space=vmem, size = 0x400, scoped, tag = 'output window, operand 1, single buffered']
    #allocation5 [shape = 's32[1]{0}', space=sflag, size = 0x4, scoped, tag = 'scoped memory for tpu_custom_call.1']
    %11 = vsyncpa [#allocation3], 0
    %12 = vsyncpa [#allocation5], 0
    // Predicated region
    $region2: #{tpu_custom_call.1} parent=1 // pred_check
      _
    $region3: #{tpu_custom_call.1} parent=1 // pred_check_branch
      %14 = sbr.rel (0) target = $region5
    $region4: #{tpu_custom_call.1} parent=1 // pred_region
      _
    $region5: #{tpu_custom_call.1} parent=1 // pred_fallthru
      _
    // Predicated region
    $region6: #{tpu_custom_call.1} parent=1 // pred_check
      _
    $region7: #{tpu_custom_call.1} parent=1 // pred_check_branch
      %16 = sbr.rel (0) target = $region9
    $region8: #{tpu_custom_call.1} parent=1 // pred_region
      _
    $region9: #{tpu_custom_call.1} parent=1 // pred_fallthru
      _
    // Predicated region
    $region10: #{tpu_custom_call.1} parent=1 // pred_check
      _
    $region11: #{tpu_custom_call.1} parent=1 // pred_check_branch
      %18 = sbr.rel (0) target = $region13
    $region12: #{tpu_custom_call.1} parent=1 // pred_region
      _
    $region13: #{tpu_custom_call.1} parent=1 // pred_fallthru
      _
    // Predicated region
    $region14: #{tpu_custom_call.1} parent=1 // pred_check
      _
    $region15: #{tpu_custom_call.1} parent=1 // pred_check_branch
      %20 = sbr.rel (0) target = $region17
    $region16: #{tpu_custom_call.1} parent=1 // pred_region
      _
    $region17: #{tpu_custom_call.1} parent=1 // pred_fallthru
      _
    %v21 = vld [vmem:[%s3] sm:$0xf]
    %v22 = vld [vmem:[%s0] sm:$0xff]
    %v23 = vld [vmem:[%s0 + $0x8] sm:$0xff]
    %v24 = vld [vmem:[%s0 + $0x10] sm:$0xff]
    %v25 = vld [vmem:[%s0 + $0x18] sm:$0xff]
    %v26 = vld [vmem:[%s0 + $0x20] sm:$0xff]
    %v27 = vld [vmem:[%s0 + $0x28] sm:$0xff]
    %v28 = vld [vmem:[%s0 + $0x30] sm:$0xff]
    %v29 = vld [vmem:[%s0 + $0x38] sm:$0xff]
    %v30 = vld [vmem:[%s0 + $0x40] sm:$0xff]
    %v31 = vld [vmem:[%s0 + $0x48] sm:$0xff]
    %v32 = vld [vmem:[%s0 + $0x50] sm:$0xff]
    %v33 = vld [vmem:[%s0 + $0x58] sm:$0xff]
    %v34 = vld [vmem:[%s0 + $0x60] sm:$0xff]
    %v35 = vld [vmem:[%s0 + $0x68] sm:$0xff]
    %v36 = vld [vmem:[%s0 + $0x70] sm:$0xff]
    %v37 = vld [vmem:[%s0 + $0x78] sm:$0xff]
    %v38 = vld [vmem:[%s0 + $0x80] sm:$0xff]
    %v39 = vld [vmem:[%s0 + $0x88] sm:$0xff]
    %v40 = vld [vmem:[%s0 + $0x90] sm:$0xff]
    %v41 = vld [vmem:[%s0 + $0x98] sm:$0xff]
    %v42 = vld [vmem:[%s0 + $0xa0] sm:$0xff]
    %v43 = vld [vmem:[%s0 + $0xa8] sm:$0xff]
    %v44 = vld [vmem:[%s0 + $0xb0] sm:$0xff]
    %v45 = vld [vmem:[%s0 + $0xb8] sm:$0xff]
    %v46 = vld [vmem:[%s0 + $0xc0] sm:$0xff]
    %v47 = vld [vmem:[%s0 + $0xc8] sm:$0xff]
    %v48 = vld [vmem:[%s0 + $0xd0] sm:$0xff]
    %v49 = vld [vmem:[%s0 + $0xd8] sm:$0xff]
    %v50 = vld [vmem:[%s0 + $0xe0] sm:$0xff]
    %v51 = vld [vmem:[%s0 + $0xe8] sm:$0xff]
    %v52 = vld [vmem:[%s0 + $0xf0] sm:$0xff]
    %v53 = vld [vmem:[%s0 + $0xf8] sm:$0xff]
    %v56 = vunpack.c.l.s4 1983009808
    %v57 = vunpack.c.0.s8 %v56
    %v58 = vlaneseq
    %v59 = vshrl.u32 %v58, 7
    %v60 = vsub.s32 %v57, %v59
    %v61 = vrot.slane %v21, %v60
    %v62 = vcombine.high %v61, %v61
    %65 = vmatprep.subr.mxu0 0.0
    %66 = vmatpush1.msra.mxu0 %v37
    %67 = vmatprep.subr.mxu0 0.0
    %68 = vmatpush1.msra.mxu0 %v36
    %69 = vmatprep.subr.mxu0 0.0
    %70 = vmatpush1.msra.mxu0 %v35
    %71 = vmatprep.subr.mxu0 0.0
    %72 = vmatpush1.msra.mxu0 %v34
    %73 = vmatprep.subr.mxu0 0.0
    %74 = vmatpush1.msra.mxu0 %v33
    %75 = vmatprep.subr.mxu0 0.0
    %76 = vmatpush1.msra.mxu0 %v32
    %77 = vmatprep.subr.mxu0 0.0
    %78 = vmatpush1.msra.mxu0 %v31
    %79 = vmatprep.subr.mxu0 0.0
    %80 = vmatpush1.msra.mxu0 %v30
    %81 = vmatprep.subr.mxu0 0.0
    %82 = vmatpush1.msra.mxu0 %v29
    %83 = vmatprep.subr.mxu0 0.0
    %84 = vmatpush1.msra.mxu0 %v28
    %85 = vmatprep.subr.mxu0 0.0
    %86 = vmatpush1.msra.mxu0 %v27
    %87 = vmatprep.subr.mxu0 0.0
    %88 = vmatpush1.msra.mxu0 %v26
    %89 = vmatprep.subr.mxu0 0.0
    %90 = vmatpush1.msra.mxu0 %v25
    %91 = vmatprep.subr.mxu0 0.0
    %92 = vmatpush1.msra.mxu0 %v24
    %93 = vmatprep.subr.mxu0 0.0
    %94 = vmatpush1.msra.mxu0 %v23
    %95 = vmatprep.subr.mxu0 0.0
    %96 = vmatpush1.msra.mxu0 %v22
    %97 = vmatprep.subr.mxu0 0.0
    %98 = vmatpush2.msra.mxu0 %v53
    %99 = vmatprep.subr.mxu0 0.0
    %100 = vmatpush2.msra.mxu0 %v52
    %101 = vmatprep.subr.mxu0 0.0
    %102 = vmatpush2.msra.mxu0 %v51
    %103 = vmatprep.subr.mxu0 0.0
    %104 = vmatpush2.msra.mxu0 %v50
    %105 = vmatprep.subr.mxu0 0.0
    %106 = vmatpush2.msra.mxu0 %v49
    %107 = vmatprep.subr.mxu0 0.0
    %108 = vmatpush2.msra.mxu0 %v48
    %109 = vmatprep.subr.mxu0 0.0
    %110 = vmatpush2.msra.mxu0 %v47
    %111 = vmatprep.subr.mxu0 0.0
    %112 = vmatpush2.msra.mxu0 %v46
    %113 = vmatprep.subr.mxu0 0.0
    %114 = vmatpush2.msra.mxu0 %v45
    %115 = vmatprep.subr.mxu0 0.0
    %116 = vmatpush2.msra.mxu0 %v44
    %117 = vmatprep.subr.mxu0 0.0
    %118 = vmatpush2.msra.mxu0 %v43
    %119 = vmatprep.subr.mxu0 0.0
    %120 = vmatpush2.msra.mxu0 %v42
    %121 = vmatprep.subr.mxu0 0.0
    %122 = vmatpush2.msra.mxu0 %v41
    %123 = vmatprep.subr.mxu0 0.0
    %124 = vmatpush2.msra.mxu0 %v40
    %125 = vmatprep.subr.mxu0 0.0
    %126 = vmatpush2.msra.mxu0 %v39
    %127 = vmatprep.subr.mxu0 0.0
    %128 = vmatpush2.msra.mxu0 %v38
    %129 = vmatprep.mubr.f32.mxu0 %v62
    %130 = vmatmul.mubr.f32.gmra.mxu0 %v61
    %v131 = vpop.f32.mrf.mxu0
    %v132 = vadd.f32 0.0, %v131
    %v133 = vpop.f32.mrf.mxu0
    %134 = vdwg.mxu0
    %vm135 = vcmask 58368
    %v136 = vsel %vm135, %v132, -inf
    %137 = vmax.xlane.f32.xlu0 %v136
    %v138 = vpop.xlane.xlu0 %137
    %v139 = vsub.f32 %v132, %v138
    %v140 = vmul.f32 %v139, 1.442695
    %v141 = vpow.pop %v140
    %v142 = vsel %vm135, %v141, 0.0
    %143 = vadd.xlane.f32.xlu0 %v142
    %v144 = vpop.xlane.xlu0 %143
    %v145 = vrcp.pop %v144
    %v146 = vmul.f32 %v141, %v145
    %147 = vst.msk [vmem:[#allocation4] sm:$0x3] %vm135, %v146
    %v148 = vld [vmem:[%s1] sm:$0xff]
    %v149 = vld [vmem:[%s1 + $0x8] sm:$0xff]
    %vm150 = vcmask 64512
    %v152 = vsel %vm150, %v146, 0
    %154 = vmatprep.subr.mxu0 0.0
    %155 = vmatpush1.msra.mxu0 0.0
    %156 = vmatprep.subr.mxu0 0.0
    %157 = vmatpush1.msra.mxu0 0.0
    %158 = vmatprep.subr.mxu0 0.0
    %159 = vmatpush1.msra.mxu0 0.0
    %160 = vmatprep.subr.mxu0 0.0
    %161 = vmatpush1.msra.mxu0 0.0
    %162 = vmatprep.subr.mxu0 0.0
    %163 = vmatpush1.msra.mxu0 0.0
    %164 = vmatprep.subr.mxu0 0.0
    %165 = vmatpush1.msra.mxu0 0.0
    %166 = vmatprep.subr.mxu0 0.0
    %167 = vmatpush1.msra.mxu0 0.0
    %168 = vmatprep.subr.mxu0 0.0
    %169 = vmatpush1.msra.mxu0 0.0
    %170 = vmatprep.subr.mxu0 0.0
    %171 = vmatpush1.msra.mxu0 0.0
    %172 = vmatprep.subr.mxu0 0.0
    %173 = vmatpush1.msra.mxu0 0.0
    %174 = vmatprep.subr.mxu0 0.0
    %175 = vmatpush1.msra.mxu0 0.0
    %176 = vmatprep.subr.mxu0 0.0
    %177 = vmatpush1.msra.mxu0 0.0
    %178 = vmatprep.subr.mxu0 0.0
    %179 = vmatpush1.msra.mxu0 0.0
    %180 = vmatprep.subr.mxu0 0.0
    %181 = vmatpush1.msra.mxu0 0.0
    %182 = vmatprep.subr.mxu0 0.0
    %183 = vmatpush1.msra.mxu0 0.0
    %184 = vmatprep.subr.mxu0 %v149
    %185 = vmatpush1.msra.mxu0 %v148
    %186 = vmatprep.subr.mxu0 0.0
    %187 = vmatpush2.msra.mxu0 0.0
    %188 = vmatprep.subr.mxu0 0.0
    %189 = vmatpush2.msra.mxu0 0.0
    %190 = vmatprep.subr.mxu0 0.0
    %191 = vmatpush2.msra.mxu0 0.0
    %192 = vmatprep.subr.mxu0 0.0
    %193 = vmatpush2.msra.mxu0 0.0
    %194 = vmatprep.subr.mxu0 0.0
    %195 = vmatpush2.msra.mxu0 0.0
    %196 = vmatprep.subr.mxu0 0.0
    %197 = vmatpush2.msra.mxu0 0.0
    %198 = vmatprep.subr.mxu0 0.0
    %199 = vmatpush2.msra.mxu0 0.0
    %200 = vmatprep.subr.mxu0 0.0
    %201 = vmatpush2.msra.mxu0 0.0
    %202 = vmatprep.subr.mxu0 0.0
    %203 = vmatpush2.msra.mxu0 0.0
    %204 = vmatprep.subr.mxu0 0.0
    %205 = vmatpush2.msra.mxu0 0.0
    %206 = vmatprep.subr.mxu0 0.0
    %207 = vmatpush2.msra.mxu0 0.0
    %208 = vmatprep.subr.mxu0 0.0
    %209 = vmatpush2.msra.mxu0 0.0
    %210 = vmatprep.subr.mxu0 0.0
    %211 = vmatpush2.msra.mxu0 0.0
    %212 = vmatprep.subr.mxu0 0.0
    %213 = vmatpush2.msra.mxu0 0.0
    %214 = vmatprep.subr.mxu0 0.0
    %215 = vmatpush2.msra.mxu0 0.0
    %216 = vmatprep.subr.mxu0 0.0
    %217 = vmatpush2.msra.mxu0 0.0
    %218 = vmatprep.mubr.f32.mxu0 0.0
    %219 = vmatmul.mubr.f32.gmra.mxu0 %v152
    %v220 = vpop.f32.mrf.mxu0
    %v221 = vadd.f32 0.0, %v220
    %v222 = vpop.f32.mrf.mxu0
    %v223 = vadd.f32 0.0, %v222
    %224 = vdwg.mxu0
    %v227 = vcombine.low %v221, %v223
    %v229 = vunpack.c.l.s4 1983009808
    %v230 = vunpack.c.0.s8 %v229
    %v231 = vlaneseq
    %v232 = vshrl.u32 %v231, 7
    %v233 = vsub.s32 %v230, %v232
    %v234 = vrot.slane %v227, %v233
    %v236 = vmul.f32 %v21, %v234
    %v237 = vld [vmem:[%s2] sm:$0xff]
    %v238 = vld [vmem:[%s2 + $0x8] sm:$0xff]
    %v239 = vld [vmem:[%s2 + $0x10] sm:$0xff]
    %v240 = vld [vmem:[%s2 + $0x18] sm:$0xff]
    %v241 = vld [vmem:[%s2 + $0x20] sm:$0xff]
    %v242 = vld [vmem:[%s2 + $0x28] sm:$0xff]
    %v243 = vld [vmem:[%s2 + $0x30] sm:$0xff]
    %v244 = vld [vmem:[%s2 + $0x38] sm:$0xff]
    %v245 = vld [vmem:[%s2 + $0x40] sm:$0xff]
    %v246 = vld [vmem:[%s2 + $0x48] sm:$0xff]
    %v247 = vld [vmem:[%s2 + $0x50] sm:$0xff]
    %v248 = vld [vmem:[%s2 + $0x58] sm:$0xff]
    %v249 = vld [vmem:[%s2 + $0x60] sm:$0xff]
    %v250 = vld [vmem:[%s2 + $0x68] sm:$0xff]
    %v251 = vld [vmem:[%s2 + $0x70] sm:$0xff]
    %v252 = vld [vmem:[%s2 + $0x78] sm:$0xff]
    %v253 = vld [vmem:[%s2 + $0x80] sm:$0xff]
    %v254 = vld [vmem:[%s2 + $0x88] sm:$0xff]
    %v255 = vld [vmem:[%s2 + $0x90] sm:$0xff]
    %v256 = vld [vmem:[%s2 + $0x98] sm:$0xff]
    %v257 = vld [vmem:[%s2 + $0xa0] sm:$0xff]
    %v258 = vld [vmem:[%s2 + $0xa8] sm:$0xff]
    %v259 = vld [vmem:[%s2 + $0xb0] sm:$0xff]
    %v260 = vld [vmem:[%s2 + $0xb8] sm:$0xff]
    %v261 = vld [vmem:[%s2 + $0xc0] sm:$0xff]
    %v262 = vld [vmem:[%s2 + $0xc8] sm:$0xff]
    %v263 = vld [vmem:[%s2 + $0xd0] sm:$0xff]
    %v264 = vld [vmem:[%s2 + $0xd8] sm:$0xff]
    %v265 = vld [vmem:[%s2 + $0xe0] sm:$0xff]
    %v266 = vld [vmem:[%s2 + $0xe8] sm:$0xff]
    %v267 = vld [vmem:[%s2 + $0xf0] sm:$0xff]
    %v268 = vld [vmem:[%s2 + $0xf8] sm:$0xff]
    %v271 = vunpack.c.l.s4 1983009808
    %v272 = vunpack.c.0.s8 %v271
    %v273 = vlaneseq
    %v274 = vshrl.u32 %v273, 7
    %v275 = vsub.s32 %v272, %v274
    %v276 = vrot.slane %v236, %v275
    %v277 = vcombine.high %v276, %v276
    %280 = vmatprep.subr.mxu0 0.0
    %281 = vmatpush1.msra.mxu0 %v252
    %282 = vmatprep.subr.mxu0 0.0
    %283 = vmatpush1.msra.mxu0 %v251
    %284 = vmatprep.subr.mxu0 0.0
    %285 = vmatpush1.msra.mxu0 %v250
    %286 = vmatprep.subr.mxu0 0.0
    %287 = vmatpush1.msra.mxu0 %v249
    %288 = vmatprep.subr.mxu0 0.0
    %289 = vmatpush1.msra.mxu0 %v248
    %290 = vmatprep.subr.mxu0 0.0
    %291 = vmatpush1.msra.mxu0 %v247
    %292 = vmatprep.subr.mxu0 0.0
    %293 = vmatpush1.msra.mxu0 %v246
    %294 = vmatprep.subr.mxu0 0.0
    %295 = vmatpush1.msra.mxu0 %v245
    %296 = vmatprep.subr.mxu0 0.0
    %297 = vmatpush1.msra.mxu0 %v244
    %298 = vmatprep.subr.mxu0 0.0
    %299 = vmatpush1.msra.mxu0 %v243
    %300 = vmatprep.subr.mxu0 0.0
    %301 = vmatpush1.msra.mxu0 %v242
    %302 = vmatprep.subr.mxu0 0.0
    %303 = vmatpush1.msra.mxu0 %v241
    %304 = vmatprep.subr.mxu0 0.0
    %305 = vmatpush1.msra.mxu0 %v240
    %306 = vmatprep.subr.mxu0 0.0
    %307 = vmatpush1.msra.mxu0 %v239
    %308 = vmatprep.subr.mxu0 0.0
    %309 = vmatpush1.msra.mxu0 %v238
    %310 = vmatprep.subr.mxu0 0.0
    %311 = vmatpush1.msra.mxu0 %v237
    %312 = vmatprep.subr.mxu0 0.0
    %313 = vmatpush2.msra.mxu0 %v268
    %314 = vmatprep.subr.mxu0 0.0
    %315 = vmatpush2.msra.mxu0 %v267
    %316 = vmatprep.subr.mxu0 0.0
    %317 = vmatpush2.msra.mxu0 %v266
    %318 = vmatprep.subr.mxu0 0.0
    %319 = vmatpush2.msra.mxu0 %v265
    %320 = vmatprep.subr.mxu0 0.0
    %321 = vmatpush2.msra.mxu0 %v264
    %322 = vmatprep.subr.mxu0 0.0
    %323 = vmatpush2.msra.mxu0 %v263
    %324 = vmatprep.subr.mxu0 0.0
    %325 = vmatpush2.msra.mxu0 %v262
    %326 = vmatprep.subr.mxu0 0.0
    %327 = vmatpush2.msra.mxu0 %v261
    %328 = vmatprep.subr.mxu0 0.0
    %329 = vmatpush2.msra.mxu0 %v260
    %330 = vmatprep.subr.mxu0 0.0
    %331 = vmatpush2.msra.mxu0 %v259
    %332 = vmatprep.subr.mxu0 0.0
    %333 = vmatpush2.msra.mxu0 %v258
    %334 = vmatprep.subr.mxu0 0.0
    %335 = vmatpush2.msra.mxu0 %v257
    %336 = vmatprep.subr.mxu0 0.0
    %337 = vmatpush2.msra.mxu0 %v256
    %338 = vmatprep.subr.mxu0 0.0
    %339 = vmatpush2.msra.mxu0 %v255
    %340 = vmatprep.subr.mxu0 0.0
    %341 = vmatpush2.msra.mxu0 %v254
    %342 = vmatprep.subr.mxu0 0.0
    %343 = vmatpush2.msra.mxu0 %v253
    %344 = vmatprep.mubr.f32.mxu0 %v277
    %345 = vmatmul.mubr.f32.gmra.mxu0 %v276
    %v346 = vpop.f32.mrf.mxu0
    %v347 = vadd.f32 0.0, %v346
    %v348 = vpop.f32.mrf.mxu0
    %349 = vdwg.mxu0
    %vm350 = vcmask 254976
    %351 = vst.msk [vmem:[#allocation2] sm:$0x3] %vm350, %v347
    // Predicated region
    $region18: #{tpu_custom_call.1} parent=1 // pred_check
      _
    $region19: #{tpu_custom_call.1} parent=1 // pred_check_branch
      %353 = sbr.rel (0) target = $region21
    $region20: #{tpu_custom_call.1} parent=1 // pred_region
      %s355 = ssub.s32 32, 32
      %356 = vsyncadd [#allocation3], %s355
      %s358 = sshll.u32 [#allocation2], 4
      %s359 = int_to_ptr.vmem [resolvable:$true] %s358
      %361 = dma.vmem_to_hbm [thread:$0]  %s359, 32, %s4, [#allocation3]
    $region21: #{tpu_custom_call.1} parent=1 // pred_fallthru
      _
    // Predicated region
    $region22: #{tpu_custom_call.1} parent=1 // pred_check
      _
    $region23: #{tpu_custom_call.1} parent=1 // pred_check_branch
      %363 = sbr.rel (0) target = $region25
    $region24: #{tpu_custom_call.1} parent=1 // pred_region
      %s365 = ssub.s32 32, 32
      %366 = vsyncadd [#allocation5], %s365
      %s368 = sshll.u32 [#allocation4], 4
      %s369 = int_to_ptr.vmem [resolvable:$true] %s368
      %371 = dma.vmem_to_hbm [thread:$0]  %s369, 32, %s5, [#allocation5]
    $region25: #{tpu_custom_call.1} parent=1 // pred_fallthru
      _
    // Predicated region
    $region26: #{tpu_custom_call.1} parent=1 // pred_check
      _
    $region27: #{tpu_custom_call.1} parent=1 // pred_check_branch
      %373 = sbr.rel (0) target = $region29
    $region28: #{tpu_custom_call.1} parent=1 // pred_region
      %374 = dma.done [#allocation3], 32
    $region29: #{tpu_custom_call.1} parent=1 // pred_fallthru
      _
    // Predicated region
    $region30: #{tpu_custom_call.1} parent=1 // pred_check
      _
    $region31: #{tpu_custom_call.1} parent=1 // pred_check_branch
      %376 = sbr.rel (0) target = $region33
    $region32: #{tpu_custom_call.1} parent=1 // pred_region
      %377 = dma.done [#allocation5], 32
    $region33: #{tpu_custom_call.1} parent=1 // pred_fallthru
      _
    %378 = vsyncpa [#allocation3], 1
    %379 = vsyncpa [#allocation5], 1

</llo_original>
